<compile_context>
chip_gen: v6e
topology: v6e:2x2x1
jax: 0.10.0
libtpu: 0.0.40
codegen_flags: <defaults>
</compile_context>

<pallas_src>
import functools

import jax
import jax.numpy as jnp
from jax import lax
from jax.experimental import pallas as pl
from jax.experimental.pallas import tpu as pltpu


# --------------------------------------------------------------------------
# Phase 1: per-batch reductions over all tokens.
# --------------------------------------------------------------------------
def _ssa_reduce_kernel(x_ref, wk_ref, bk_ref, wv_ref, bv_ref,
                       mat_ref, ksum_ref, vsum_ref):
    # x_ref:   (C, TN)   token tile, channel-major
    # wk_ref:  (Cq, C)   key 1x1-conv weight      bk_ref: (Cq, 1)
    # wv_ref:  (C, C)    value 1x1-conv weight    bv_ref: (C, 1)
    # outputs (accumulated over the token-tile grid axis, per batch):
    #   mat_ref:  (C, Cq)   mat[c, m]  = sum_n V[c, n] * Kn[m, n]
    #   ksum_ref: (Cq, 1)   ksum[m]    = sum_n Kn[m, n]
    #   vsum_ref: (C, 1)    vsum[c]    = sum_n V[c, n]
    @pl.when(pl.program_id(1) == 0)
    def _init():
        mat_ref[...] = jnp.zeros_like(mat_ref)
        ksum_ref[...] = jnp.zeros_like(ksum_ref)
        vsum_ref[...] = jnp.zeros_like(vsum_ref)

    x = x_ref[...]

    k = jnp.dot(wk_ref[...], x, preferred_element_type=jnp.float32)
    k = k + bk_ref[...].astype(jnp.float32)
    # L2-normalize every token (column) over its Cq channels (f32 stats).
    k = k * lax.rsqrt(jnp.sum(k * k, axis=0, keepdims=True))

    v = jnp.dot(wv_ref[...], x, preferred_element_type=jnp.float32)
    v = v + bv_ref[...].astype(jnp.float32)

    kd = k.astype(x.dtype)
    vd = v.astype(x.dtype)
    # mat += V @ Kn^T   (contract the token axis of both), f32 accumulator.
    mat_ref[...] += lax.dot_general(
        vd, kd, (((1,), (1,)), ((), ())), preferred_element_type=jnp.float32)
    ksum_ref[...] += jnp.sum(k, axis=1, keepdims=True)
    vsum_ref[...] += jnp.sum(v, axis=1, keepdims=True)


# --------------------------------------------------------------------------
# Phase 2: per-token application of the attention + residual.
# --------------------------------------------------------------------------
def _ssa_apply_kernel(x_ref, wq_ref, bq_ref, mat_ref, kse_ref, vsum_ref,
                      o_ref, *, n_tokens):
    # x_ref:   (C, TN)    wq_ref: (Cq, C)   bq_ref: (Cq, 1)
    # mat_ref: (C, Cq)    gamma already folded in
    # kse_ref: (Cq, 1)    k_sum + eps   (f32)
    # vsum_ref:(C, 1)     gamma * v_sum (f32)
    # o_ref:   (C, TN)
    x = x_ref[...]

    q = jnp.dot(wq_ref[...], x, preferred_element_type=jnp.float32)
    q = q + bq_ref[...].astype(jnp.float32)
    q = q * lax.rsqrt(jnp.sum(q * q, axis=0, keepdims=True))

    # tailor_sum[n] = 1 / (N + sum_m Qn[m, n] * (k_sum[m] + eps))
    qk = jnp.sum(q * kse_ref[...].astype(jnp.float32), axis=0, keepdims=True)
    tailor = 1.0 / (jnp.float32(n_tokens) + qk)                   # (1, TN)

    qd = q.astype(x.dtype)
    attn = jnp.dot(mat_ref[...], qd,
                   preferred_element_type=jnp.float32)            # (C, TN)
    weight_value = (vsum_ref[...].astype(jnp.float32) + attn) * tailor
    o_ref[...] = (x.astype(jnp.float32) + weight_value).astype(o_ref.dtype)


# --------------------------------------------------------------------------
# Wrapper
# --------------------------------------------------------------------------
def shared_spatial_attention(x, params, *, eps=1e-6, max_tile_n=512):
    """SharedSpatialAttention forward.

    Args:
      x:      (B, C, W, H) input feature map.
      params: dict with
        wq, wk: (C//8, C)   bq, bk: (C//8,)
        wv:     (C, C)      bv:     (C,)
        gamma:  (1,) residual scale.
    Returns:
      (B, C, W, H) — same as the PyTorch module (which is only well-defined
      for square inputs; the flat token layout is preserved here).
    """
    B, C, Wd, Ht = x.shape
    assert C % 8 == 0, "in_places must be divisible by 8"
    Cq = C // 8
    N = Wd * Ht
    xf = x.reshape(B, C, N)          # free reshape, channel-major, no HBM copy

    # Lane-dense token tiling: multiple of 128 dividing N, else one full tile.
    tile_n = N
    for cand in (512, 384, 256, 128):
        if cand <= max_tile_n and N % cand == 0:
            tile_n = cand
            break
    # TODO(synk): if N is huge and not a multiple of 128, add a masked ragged
    # tail instead of a single full-row tile.
    nt = N // tile_n

    cdt = x.dtype
    wq = params['wq'].astype(cdt)
    wk = params['wk'].astype(cdt)
    wv = params['wv'].astype(cdt)
    bq = params['bq'].reshape(Cq, 1).astype(jnp.float32)
    bk = params['bk'].reshape(Cq, 1).astype(jnp.float32)
    bv = params['bv'].reshape(C, 1).astype(jnp.float32)
    gamma = jnp.asarray(params['gamma'], jnp.float32).reshape(())

    # ---- phase 1: reductions over all tokens ----
    mat, ksum, vsum = pl.pallas_call(
        _ssa_reduce_kernel,
        out_shape=(
            jax.ShapeDtypeStruct((B, C, Cq), jnp.float32),
            jax.ShapeDtypeStruct((B, Cq, 1), jnp.float32),
            jax.ShapeDtypeStruct((B, C, 1), jnp.float32),
        ),
        grid_spec=pltpu.PrefetchScalarGridSpec(
            num_scalar_prefetch=0,
            grid=(B, nt),
            in_specs=[
                pl.BlockSpec((None, C, tile_n), lambda b, t: (b, 0, t)),
                pl.BlockSpec((Cq, C), lambda b, t: (0, 0)),
                pl.BlockSpec((Cq, 1), lambda b, t: (0, 0)),
                pl.BlockSpec((C, C), lambda b, t: (0, 0)),
                pl.BlockSpec((C, 1), lambda b, t: (0, 0)),
            ],
            out_specs=[
                pl.BlockSpec((None, C, Cq), lambda b, t: (b, 0, 0)),
                pl.BlockSpec((None, Cq, 1), lambda b, t: (b, 0, 0)),
                pl.BlockSpec((None, C, 1), lambda b, t: (b, 0, 0)),
            ],
        ),
        compiler_params=pltpu.CompilerParams(
            dimension_semantics=("parallel", "arbitrary")),
    )(xf, wk, bk, wv, bv)

    # Fold gamma into the tiny per-batch tensors (exact algebra).
    mat_g = (gamma * mat).astype(cdt)          # (B, C, Cq)
    vsum_g = gamma * vsum                      # (B, C, 1), f32
    kse = ksum + jnp.float32(eps)              # (B, Cq, 1), f32

    # ---- phase 2: apply attention + residual ----
    out = pl.pallas_call(
        functools.partial(_ssa_apply_kernel, n_tokens=float(N)),
        out_shape=jax.ShapeDtypeStruct((B, C, N), x.dtype),
        grid_spec=pltpu.PrefetchScalarGridSpec(
            num_scalar_prefetch=0,
            grid=(B, nt),
            in_specs=[
                pl.BlockSpec((None, C, tile_n), lambda b, t: (b, 0, t)),
                pl.BlockSpec((Cq, C), lambda b, t: (0, 0)),
                pl.BlockSpec((Cq, 1), lambda b, t: (0, 0)),
                pl.BlockSpec((None, C, Cq), lambda b, t: (b, 0, 0)),
                pl.BlockSpec((None, Cq, 1), lambda b, t: (b, 0, 0)),
                pl.BlockSpec((None, C, 1), lambda b, t: (b, 0, 0)),
            ],
            out_specs=pl.BlockSpec((None, C, tile_n), lambda b, t: (b, 0, t)),
        ),
        compiler_params=pltpu.CompilerParams(
            dimension_semantics=("parallel", "parallel")),
    )(xf, wq, bq, mat_g, kse, vsum_g)

    return out.reshape(B, C, Wd, Ht)


# --------------------------------------------------------------------------
# Pure-JAX reference replicating the PyTorch forward.
# --------------------------------------------------------------------------
def _reference(x, params, eps=1e-6):
    B, C, Wd, Ht = x.shape
    N = Wd * Ht
    xf = x.reshape(B, C, N)
    q = jnp.einsum('mc,bcn->bmn', params['wq'], xf) + params['bq'][None, :, None]
    k = jnp.einsum('mc,bcn->bmn', params['wk'], xf) + params['bk'][None, :, None]
    v = jnp.einsum('mc,bcn->bmn', params['wv'], xf) + params['bv'][None, :, None]
    qn = q / jnp.sqrt(jnp.sum(q * q, axis=-2, keepdims=True))
    kn = k / jnp.sqrt(jnp.sum(k * k, axis=-2, keepdims=True))
    qn = jnp.transpose(qn, (0, 2, 1))                             # (B, N, Cq)
    tailor = 1.0 / (N + jnp.einsum('bnm,bm->bn', qn,
                                   jnp.sum(kn, axis=-1) + eps))   # (B, N)
    value_sum = jnp.sum(v, axis=-1, keepdims=True)                # (B, C, 1)
    matrix = jnp.einsum('bmn,bcn->bmc', kn, v)                    # (B, Cq, C)
    matrix_sum = value_sum + jnp.einsum('bnm,bmc->bcn', qn, matrix)
    weight_value = matrix_sum * tailor[:, None, :]
    g = jnp.asarray(params['gamma']).reshape(())
    return (xf + g * weight_value).reshape(B, C, Wd, Ht)


if __name__ == "__main__":
    key = jax.random.PRNGKey(0)
    B, C, Wd, Ht = 2, 64, 16, 16          # in_places = 64 -> Cq = 8, N = 256
    Cq = C // 8

    kx, kq, kk, kv, kbq, kbk, kbv = jax.random.split(key, 7)
    x = jax.random.normal(kx, (B, C, Wd, Ht), dtype=jnp.float32)
    params = dict(
        wq=jax.random.normal(kq, (Cq, C), jnp.float32) * 0.1,
        bq=jax.random.normal(kbq, (Cq,), jnp.float32) * 0.01,
        wk=jax.random.normal(kk, (Cq, C), jnp.float32) * 0.1,
        bk=jax.random.normal(kbk, (Cq,), jnp.float32) * 0.01,
        wv=jax.random.normal(kv, (C, C), jnp.float32) * 0.05,
        bv=jax.random.normal(kbv, (C,), jnp.float32) * 0.01,
        # nn.Parameter(torch.zeros(1)) initializes to 0; use a nonzero value
        # so the attention path is actually exercised by the check.
        gamma=jnp.asarray([2.0], jnp.float32),
    )

    out = shared_spatial_attention(x, params)
    out = jax.block_until_ready(out)

    ref = _reference(x, params)
    assert out.shape == x.shape, out.shape
    max_err = float(jnp.max(jnp.abs(out - ref)))
    assert jnp.allclose(out, ref, atol=1e-3, rtol=1e-3), f"mismatch: {max_err}"

    print("KERNEL_OK")
</pallas_src>

<mosaic_0001>
module attributes {stable_mosaic.version = 11 : i64} {
  func.func @_ssa_reduce_kernel(%arg0: i32, %arg1: i32, %arg2: memref<1x64x256xf32, #tpu.memory_space<vmem>>, %arg3: memref<8x64xf32, #tpu.memory_space<vmem>>, %arg4: memref<8x1xf32, #tpu.memory_space<vmem>>, %arg5: memref<64x64xf32, #tpu.memory_space<vmem>>, %arg6: memref<64x1xf32, #tpu.memory_space<vmem>>, %arg7: memref<1x64x8xf32, #tpu.memory_space<vmem>>, %arg8: memref<1x8x1xf32, #tpu.memory_space<vmem>>, %arg9: memref<1x64x1xf32, #tpu.memory_space<vmem>>) attributes {dimension_semantics = [#tpu.dimension_semantics<parallel>, #tpu.dimension_semantics<arbitrary>], iteration_bounds = array<i64: 2, 1>, scalar_prefetch = 0 : i64, scratch_operands = 0 : i64, tpu.core_type = #tpu.core_type<tc>, window_params = [{transform_indices = @transform_0, window_bounds = array<i64: 1, 64, 256>}, {pipeline_mode = #tpu.pipeline_mode<synchronous>, transform_indices = @transform_1, window_bounds = array<i64: 8, 64>}, {pipeline_mode = #tpu.pipeline_mode<synchronous>, transform_indices = @transform_2, window_bounds = array<i64: 8, 1>}, {pipeline_mode = #tpu.pipeline_mode<synchronous>, transform_indices = @transform_3, window_bounds = array<i64: 64, 64>}, {pipeline_mode = #tpu.pipeline_mode<synchronous>, transform_indices = @transform_4, window_bounds = array<i64: 64, 1>}, {transform_indices = @transform_5, window_bounds = array<i64: 1, 64, 8>}, {transform_indices = @transform_6, window_bounds = array<i64: 1, 8, 1>}, {transform_indices = @transform_7, window_bounds = array<i64: 1, 64, 1>}]} {
    %c0_i32 = arith.constant 0 : i32
    %0 = arith.cmpi eq, %arg1, %c0_i32 : i32
    %1 = arith.extui %0 : i1 to i32
    %c0_i32_0 = arith.constant 0 : i32
    %2 = arith.cmpi ne, %1, %c0_i32_0 : i32
    scf.if %2 {
      %cst_34 = arith.constant 0.000000e+00 : f32
      %44 = vector.broadcast %cst_34 : f32 to vector<64x8xf32>
      %c0_35 = arith.constant 0 : index
      %c0_36 = arith.constant 0 : index
      %c0_37 = arith.constant 0 : index
      %45 = vector.load %arg7[%c0_35, %c0_36, %c0_37] : memref<1x64x8xf32, #tpu.memory_space<vmem>>, vector<1x64x8xf32>
      %46 = vector.shape_cast %45 : vector<1x64x8xf32> to vector<64x8xf32>
      %47 = vector.shape_cast %44 : vector<64x8xf32> to vector<1x64x8xf32>
      tpu.vector_store %arg7[%c0_35, %c0_36, %c0_37], %47 {strides = array<i32>} : memref<1x64x8xf32, #tpu.memory_space<vmem>>, vector<1x64x8xf32>,
      %cst_38 = arith.constant 0.000000e+00 : f32
      %48 = vector.broadcast %cst_38 : f32 to vector<8x1xf32>
      %c0_39 = arith.constant 0 : index
      %c0_40 = arith.constant 0 : index
      %c0_41 = arith.constant 0 : index
      %49 = vector.load %arg8[%c0_39, %c0_40, %c0_41] : memref<1x8x1xf32, #tpu.memory_space<vmem>>, vector<1x8x1xf32>
      %50 = vector.shape_cast %49 : vector<1x8x1xf32> to vector<8x1xf32>
      %51 = vector.shape_cast %48 : vector<8x1xf32> to vector<1x8x1xf32>
      tpu.vector_store %arg8[%c0_39, %c0_40, %c0_41], %51 {strides = array<i32>} : memref<1x8x1xf32, #tpu.memory_space<vmem>>, vector<1x8x1xf32>,
      %cst_42 = arith.constant 0.000000e+00 : f32
      %52 = vector.broadcast %cst_42 : f32 to vector<64x1xf32>
      %c0_43 = arith.constant 0 : index
      %c0_44 = arith.constant 0 : index
      %c0_45 = arith.constant 0 : index
      %53 = vector.load %arg9[%c0_43, %c0_44, %c0_45] : memref<1x64x1xf32, #tpu.memory_space<vmem>>, vector<1x64x1xf32>
      %54 = vector.shape_cast %53 : vector<1x64x1xf32> to vector<64x1xf32>
      %55 = vector.shape_cast %52 : vector<64x1xf32> to vector<1x64x1xf32>
      tpu.vector_store %arg9[%c0_43, %c0_44, %c0_45], %55 {strides = array<i32>} : memref<1x64x1xf32, #tpu.memory_space<vmem>>, vector<1x64x1xf32>,
    } else {
    }
    %c0 = arith.constant 0 : index
    %c0_1 = arith.constant 0 : index
    %c0_2 = arith.constant 0 : index
    %3 = vector.load %arg2[%c0, %c0_1, %c0_2] : memref<1x64x256xf32, #tpu.memory_space<vmem>>, vector<1x64x256xf32>
    %4 = vector.shape_cast %3 : vector<1x64x256xf32> to vector<64x256xf32>
    %c0_3 = arith.constant 0 : index
    %c0_4 = arith.constant 0 : index
    %5 = vector.load %arg3[%c0_3, %c0_4] : memref<8x64xf32, #tpu.memory_space<vmem>>, vector<8x64xf32>
    %cst = arith.constant dense<0.000000e+00> : vector<8x256xf32>
    %6 = tpu.matmul %5, %4, %cst {dimension_numbers = #tpu.dot_dimension_numbers<[1], [0], [0], [1], [0, 0, 1, 1], [], []>} : vector<8x64xf32>, vector<64x256xf32>, vector<8x256xf32> -> vector<8x256xf32>
    %c0_5 = arith.constant 0 : index
    %c0_6 = arith.constant 0 : index
    %7 = vector.load %arg4[%c0_5, %c0_6] : memref<8x1xf32, #tpu.memory_space<vmem>>, vector<8x1xf32>
    %8 = vector.broadcast %7 : vector<8x1xf32> to vector<8x256xf32>
    %9 = arith.addf %6, %8 : vector<8x256xf32>
    %10 = arith.mulf %9, %9 : vector<8x256xf32>
    %cst_7 = arith.constant dense<0.000000e+00> : vector<256xf32>
    %11 = vector.multi_reduction <add>, %10, %cst_7 [0] : vector<8x256xf32> to vector<256xf32>
    %12 = vector.shape_cast %11 : vector<256xf32> to vector<1x256xf32>
    %13 = math.rsqrt %12 : vector<1x256xf32>
    %14 = vector.broadcast %13 : vector<1x256xf32> to vector<8x256xf32>
    %15 = arith.mulf %9, %14 : vector<8x256xf32>
    %c0_8 = arith.constant 0 : index
    %c0_9 = arith.constant 0 : index
    %16 = vector.load %arg5[%c0_8, %c0_9] : memref<64x64xf32, #tpu.memory_space<vmem>>, vector<64x64xf32>
    %cst_10 = arith.constant dense<0.000000e+00> : vector<64x256xf32>
    %17 = tpu.matmul %16, %4, %cst_10 {dimension_numbers = #tpu.dot_dimension_numbers<[1], [0], [0], [1], [0, 0, 1, 1], [], []>} : vector<64x64xf32>, vector<64x256xf32>, vector<64x256xf32> -> vector<64x256xf32>
    %c0_11 = arith.constant 0 : index
    %c0_12 = arith.constant 0 : index
    %18 = vector.load %arg6[%c0_11, %c0_12] : memref<64x1xf32, #tpu.memory_space<vmem>>, vector<64x1xf32>
    %19 = vector.broadcast %18 : vector<64x1xf32> to vector<64x256xf32>
    %20 = arith.addf %17, %19 : vector<64x256xf32>
    %c0_13 = arith.constant 0 : index
    %c0_14 = arith.constant 0 : index
    %c0_15 = arith.constant 0 : index
    %21 = vector.load %arg7[%c0_13, %c0_14, %c0_15] : memref<1x64x8xf32, #tpu.memory_space<vmem>>, vector<1x64x8xf32>
    %22 = vector.shape_cast %21 : vector<1x64x8xf32> to vector<64x8xf32>
    %cst_16 = arith.constant dense<0.000000e+00> : vector<64x8xf32>
    %23 = tpu.matmul %20, %15, %cst_16 {dimension_numbers = #tpu.dot_dimension_numbers<[1], [1], [0], [0], [0, 0, 1, 0], [], []>} : vector<64x256xf32>, vector<8x256xf32>, vector<64x8xf32> -> vector<64x8xf32>
    %24 = arith.addf %22, %23 : vector<64x8xf32>
    %c0_17 = arith.constant 0 : index
    %c0_18 = arith.constant 0 : index
    %c0_19 = arith.constant 0 : index
    %25 = vector.load %arg7[%c0_17, %c0_18, %c0_19] : memref<1x64x8xf32, #tpu.memory_space<vmem>>, vector<1x64x8xf32>
    %26 = vector.shape_cast %25 : vector<1x64x8xf32> to vector<64x8xf32>
    %27 = vector.shape_cast %24 : vector<64x8xf32> to vector<1x64x8xf32>
    tpu.vector_store %arg7[%c0_17, %c0_18, %c0_19], %27 {strides = array<i32>} : memref<1x64x8xf32, #tpu.memory_space<vmem>>, vector<1x64x8xf32>,
    %c0_20 = arith.constant 0 : index
    %c0_21 = arith.constant 0 : index
    %c0_22 = arith.constant 0 : index
    %28 = vector.load %arg8[%c0_20, %c0_21, %c0_22] : memref<1x8x1xf32, #tpu.memory_space<vmem>>, vector<1x8x1xf32>
    %29 = vector.shape_cast %28 : vector<1x8x1xf32> to vector<8x1xf32>
    %cst_23 = arith.constant dense<0.000000e+00> : vector<8xf32>
    %30 = vector.multi_reduction <add>, %15, %cst_23 [1] : vector<8x256xf32> to vector<8xf32>
    %31 = vector.shape_cast %30 : vector<8xf32> to vector<8x1xf32>
    %32 = arith.addf %29, %31 : vector<8x1xf32>
    %c0_24 = arith.constant 0 : index
    %c0_25 = arith.constant 0 : index
    %c0_26 = arith.constant 0 : index
    %33 = vector.load %arg8[%c0_24, %c0_25, %c0_26] : memref<1x8x1xf32, #tpu.memory_space<vmem>>, vector<1x8x1xf32>
    %34 = vector.shape_cast %33 : vector<1x8x1xf32> to vector<8x1xf32>
    %35 = vector.shape_cast %32 : vector<8x1xf32> to vector<1x8x1xf32>
    tpu.vector_store %arg8[%c0_24, %c0_25, %c0_26], %35 {strides = array<i32>} : memref<1x8x1xf32, #tpu.memory_space<vmem>>, vector<1x8x1xf32>,
    %c0_27 = arith.constant 0 : index
    %c0_28 = arith.constant 0 : index
    %c0_29 = arith.constant 0 : index
    %36 = vector.load %arg9[%c0_27, %c0_28, %c0_29] : memref<1x64x1xf32, #tpu.memory_space<vmem>>, vector<1x64x1xf32>
    %37 = vector.shape_cast %36 : vector<1x64x1xf32> to vector<64x1xf32>
    %cst_30 = arith.constant dense<0.000000e+00> : vector<64xf32>
    %38 = vector.multi_reduction <add>, %20, %cst_30 [1] : vector<64x256xf32> to vector<64xf32>
    %39 = vector.shape_cast %38 : vector<64xf32> to vector<64x1xf32>
    %40 = arith.addf %37, %39 : vector<64x1xf32>
    %c0_31 = arith.constant 0 : index
    %c0_32 = arith.constant 0 : index
    %c0_33 = arith.constant 0 : index
    %41 = vector.load %arg9[%c0_31, %c0_32, %c0_33] : memref<1x64x1xf32, #tpu.memory_space<vmem>>, vector<1x64x1xf32>
    %42 = vector.shape_cast %41 : vector<1x64x1xf32> to vector<64x1xf32>
    %43 = vector.shape_cast %40 : vector<64x1xf32> to vector<1x64x1xf32>
    tpu.vector_store %arg9[%c0_31, %c0_32, %c0_33], %43 {strides = array<i32>} : memref<1x64x1xf32, #tpu.memory_space<vmem>>, vector<1x64x1xf32>,
    return
  }
  func.func @transform_0(%arg0: i32, %arg1: i32) -> (i32, i32, i32) {
    %c0_i32 = arith.constant 0 : i32
    %c0_i32_0 = arith.constant 0 : i32
    return %arg0, %c0_i32, %arg1 : i32, i32, i32
  }
  func.func @transform_1(%arg0: i32, %arg1: i32) -> (i32, i32) {
    %c0_i32 = arith.constant 0 : i32
    %c0_i32_0 = arith.constant 0 : i32
    %c0_i32_1 = arith.constant 0 : i32
    return %c0_i32, %c0_i32_0 : i32, i32
  }
  func.func @transform_2(%arg0: i32, %arg1: i32) -> (i32, i32) {
    %c0_i32 = arith.constant 0 : i32
    %c0_i32_0 = arith.constant 0 : i32
    %c0_i32_1 = arith.constant 0 : i32
    return %c0_i32, %c0_i32_0 : i32, i32
  }
  func.func @transform_3(%arg0: i32, %arg1: i32) -> (i32, i32) {
    %c0_i32 = arith.constant 0 : i32
    %c0_i32_0 = arith.constant 0 : i32
    %c0_i32_1 = arith.constant 0 : i32
    return %c0_i32, %c0_i32_0 : i32, i32
  }
  func.func @transform_4(%arg0: i32, %arg1: i32) -> (i32, i32) {
    %c0_i32 = arith.constant 0 : i32
    %c0_i32_0 = arith.constant 0 : i32
    %c0_i32_1 = arith.constant 0 : i32
    return %c0_i32, %c0_i32_0 : i32, i32
  }
  func.func @transform_5(%arg0: i32, %arg1: i32) -> (i32, i32, i32) {
    %c0_i32 = arith.constant 0 : i32
    %c0_i32_0 = arith.constant 0 : i32
    %c0_i32_1 = arith.constant 0 : i32
    return %arg0, %c0_i32, %c0_i32_0 : i32, i32, i32
  }
  func.func @transform_6(%arg0: i32, %arg1: i32) -> (i32, i32, i32) {
    %c0_i32 = arith.constant 0 : i32
    %c0_i32_0 = arith.constant 0 : i32
    %c0_i32_1 = arith.constant 0 : i32
    return %arg0, %c0_i32, %c0_i32_0 : i32, i32, i32
  }
  func.func @transform_7(%arg0: i32, %arg1: i32) -> (i32, i32, i32) {
    %c0_i32 = arith.constant 0 : i32
    %c0_i32_0 = arith.constant 0 : i32
    %c0_i32_1 = arith.constant 0 : i32
    return %arg0, %c0_i32, %c0_i32_0 : i32, i32, i32
  }
}

</mosaic_0001>

<llo_original>
// kernel: tpu_custom_call.1
$region0: #{tpu_custom_call.1}
  #allocation0 [shape = 'u32[]', space=smem, size = 0x4, offset = 0x4, fixed_abs, tag = 'smem constant byte address 0x4 - core index']
  #allocation1 [shape = 'u32[144,128]{1,0:T(1,128)}', space=vmem, size = 0x12000, scoped, tag = 'internal scratch']
  %s0 = inlined_call_operand.hbm [shape: f32[2,64,256], index: 0, kind: input, shape index: {}]
  %s1 = inlined_call_operand.vmem [shape: f32[8,64], index: 1, kind: input, shape index: {}]
  %s2 = inlined_call_operand.vmem [shape: f32[8,1], index: 2, kind: input, shape index: {}]
  %s3 = inlined_call_operand.vmem [shape: f32[64,64], index: 3, kind: input, shape index: {}]
  %s4 = inlined_call_operand.vmem [shape: f32[64,1], index: 4, kind: input, shape index: {}]
  %s5 = inlined_call_operand.vmem [shape: f32[2,64,8], index: 5, kind: output, shape index: {0}]
  %s6 = inlined_call_operand.vmem [shape: f32[2,8,1], index: 6, kind: output, shape index: {1}]
  %s7 = inlined_call_operand.vmem [shape: f32[2,64,1], index: 7, kind: output, shape index: {2}]
  %8 = xla_tuple %s5, %s6, %s7
  %s9 = sld [smem:[#allocation0]]
  $region77: #{tpu_custom_call.1} parent=0
    _
  %s11 = ssub.s32 1, %s9
  %s12 = scalar_select 0, %s11, %s9
  $region1: #{tpu_custom_call.1} parent=0
    #allocation2 [shape = 'u8[131072]{0}', space=vmem, size = 0x20000, scoped, tag = 'input window, operand 0']
    #allocation3 [shape = 's32[2]{0}', space=sflag, size = 0x8, scoped, tag = 'scoped memory for tpu_custom_call.1']
    %13 = vsyncpa [#allocation3], 0
    %s14 = scalar_lea.sflag [#allocation3], 1
    %15 = vsyncpa %s14, 0
    loop: start=0, step=1, limit=4
    $region2: #{tpu_custom_call.1} parent=1 // loop_pre_header
      _
    $region3: #{tpu_custom_call.1} parent=1 // loop_header
      %s17 = sphi 0, %s21
      %p18 = scmp.ge.s32.totalorder %s17, 4
      %s24 = sphi 0, %s36
      %s25 = sphi 0, %s32
      %s26 = sphi 0, %s24
      %s27 = sphi 0, %s25
      %s28 = sphi 0, %s26
      %s29 = sphi 0, %s27
      %s41 = sphi 0, %s43
      %s44 = sphi 0, %s41
      %s45 = sphi 0, %s44
      %s61 = sphi 0, %s45
      %s65 = sphi 0, %s65
      %s67 = sphi 0, %s65
      %s68 = sphi 0, %s67
      %s82 = sphi 0, %s68
      %s86 = sphi 0, %s86
      %s88 = sphi 0, %s86
      %s89 = sphi 0, %s88
      %s103 = sphi 0, %s89
      %s107 = sphi 0, %s107
      %s109 = sphi 0, %s107
      %s110 = sphi 0, %s109
      %s124 = sphi 0, %s110
      %s128 = sphi 0, %s128
      %s130 = sphi 0, %s128
      %s131 = sphi 0, %s130
      %s145 = sphi 0, %s131
      %s151 = sphi 0, %s153
      %s154 = sphi 0, %s151
      %s155 = sphi 0, %s154
      %s171 = sphi 0, %s155
      %s177 = sphi 0, %s179
      %s180 = sphi 0, %s177
      %s181 = sphi 0, %s180
      %s197 = sphi 0, %s181
      %s203 = sphi 0, %s205
      %s206 = sphi 0, %s203
      %s207 = sphi 0, %s206
      %s223 = sphi 0, %s207
    $region4: #{tpu_custom_call.1} parent=1 // loop_header_branch
      %20 = sbr.rel (%p18) target = $region8
    $region5: #{tpu_custom_call.1} parent=1 // loop_body
      %s22 = ssub.s32 %s17, 1
      %s23 = ssub.s32 %s17, 2
      %s30 = sadd.s32 1, %s25
      %p31 = scmp.ge.s32.totalorder %s30, 1
      %s32 = scalar_select %p31, 0, %s30
      %s33 = sadd.s32 1, %s24
      %s34 = scalar_select %p31, %s33, %s24
      %p35 = scmp.ge.s32.totalorder %s34, 2
      %s36 = scalar_select %p35, 0, %s34
      %s37 = ssub.s32 %s24, %s36
      %s38 = ssub.s32 %s25, %s32
      %s39 = sor.u32 %s37, %s38
      %p40 = scmp.eq.s32.totalorder %s39, 0
      %s42 = sadd.s32 %s41, 1
      %s43 = scalar_select %p40, %s41, %s42
      %p46 = pneg %p40
      %p47 = scmp.eq.s32.totalorder %s17, 1
      %p48 = por %p46, %p47
      %p49 = scmp.ne.s32.totalorder %s41, %s44
      %p50 = scmp.eq.s32.totalorder %s17, 0
      %p51 = por %p49, %p50
      %p52 = scmp.ne.s32.totalorder %s41, %s44
      %p53 = scmp.eq.s32.totalorder %s22, 1
      %p54 = por %p52, %p53
      %p55 = scmp.ne.s32.totalorder %s44, %s45
      %p56 = scmp.eq.s32.totalorder %s22, 0
      %p57 = por %p55, %p56
      %p58 = scmp.ne.s32.totalorder %s44, %s45
      %p59 = scmp.eq.s32.totalorder %s23, 1
      %p60 = por %p58, %p59
      %p62 = scmp.ne.s32.totalorder %s45, %s61
      %p63 = scmp.eq.s32.totalorder %s23, 0
      %p64 = por %p62, %p63
      %s66 = sadd.s32 %s65, 1
      %p69 = scmp.eq.s32.totalorder %s17, 1
      %p70 = scmp.ne.s32.totalorder %s65, %s67
      %p71 = scmp.eq.s32.totalorder %s17, 0
      %p72 = por %p70, %p71
      %p73 = scmp.ne.s32.totalorder %s65, %s67
      %p74 = scmp.eq.s32.totalorder %s22, 1
      %p75 = por %p73, %p74
      %p76 = scmp.ne.s32.totalorder %s67, %s68
      %p77 = scmp.eq.s32.totalorder %s22, 0
      %p78 = por %p76, %p77
      %p79 = scmp.ne.s32.totalorder %s67, %s68
      %p80 = scmp.eq.s32.totalorder %s23, 1
      %p81 = por %p79, %p80
      %p83 = scmp.ne.s32.totalorder %s68, %s82
      %p84 = scmp.eq.s32.totalorder %s23, 0
      %p85 = por %p83, %p84
      %s87 = sadd.s32 %s86, 1
      %p90 = scmp.eq.s32.totalorder %s17, 1
      %p91 = scmp.ne.s32.totalorder %s86, %s88
      %p92 = scmp.eq.s32.totalorder %s17, 0
      %p93 = por %p91, %p92
      %p94 = scmp.ne.s32.totalorder %s86, %s88
      %p95 = scmp.eq.s32.totalorder %s22, 1
      %p96 = por %p94, %p95
      %p97 = scmp.ne.s32.totalorder %s88, %s89
      %p98 = scmp.eq.s32.totalorder %s22, 0
      %p99 = por %p97, %p98
      %p100 = scmp.ne.s32.totalorder %s88, %s89
      %p101 = scmp.eq.s32.totalorder %s23, 1
      %p102 = por %p100, %p101
      %p104 = scmp.ne.s32.totalorder %s89, %s103
      %p105 = scmp.eq.s32.totalorder %s23, 0
      %p106 = por %p104, %p105
      %s108 = sadd.s32 %s107, 1
      %p111 = scmp.eq.s32.totalorder %s17, 1
      %p112 = scmp.ne.s32.totalorder %s107, %s109
      %p113 = scmp.eq.s32.totalorder %s17, 0
      %p114 = por %p112, %p113
      %p115 = scmp.ne.s32.totalorder %s107, %s109
      %p116 = scmp.eq.s32.totalorder %s22, 1
      %p117 = por %p115, %p116
      %p118 = scmp.ne.s32.totalorder %s109, %s110
      %p119 = scmp.eq.s32.totalorder %s22, 0
      %p120 = por %p118, %p119
      %p121 = scmp.ne.s32.totalorder %s109, %s110
      %p122 = scmp.eq.s32.totalorder %s23, 1
      %p123 = por %p121, %p122
      %p125 = scmp.ne.s32.totalorder %s110, %s124
      %p126 = scmp.eq.s32.totalorder %s23, 0
      %p127 = por %p125, %p126
      %s129 = sadd.s32 %s128, 1
      %p132 = scmp.eq.s32.totalorder %s17, 1
      %p133 = scmp.ne.s32.totalorder %s128, %s130
      %p134 = scmp.eq.s32.totalorder %s17, 0
      %p135 = por %p133, %p134
      %p136 = scmp.ne.s32.totalorder %s128, %s130
      %p137 = scmp.eq.s32.totalorder %s22, 1
      %p138 = por %p136, %p137
      %p139 = scmp.ne.s32.totalorder %s130, %s131
      %p140 = scmp.eq.s32.totalorder %s22, 0
      %p141 = por %p139, %p140
      %p142 = scmp.ne.s32.totalorder %s130, %s131
      %p143 = scmp.eq.s32.totalorder %s23, 1
      %p144 = por %p142, %p143
      %p146 = scmp.ne.s32.totalorder %s131, %s145
      %p147 = scmp.eq.s32.totalorder %s23, 0
      %p148 = por %p146, %p147
      %s149 = ssub.s32 %s24, %s36
      %p150 = scmp.eq.s32.totalorder %s149, 0
      %s152 = sadd.s32 %s151, 1
      %s153 = scalar_select %p150, %s151, %s152
      %p156 = pneg %p150
      %p157 = scmp.eq.s32.totalorder %s17, 1
      %p158 = por %p156, %p157
      %p159 = scmp.ne.s32.totalorder %s151, %s154
      %p160 = scmp.eq.s32.totalorder %s17, 0
      %p161 = por %p159, %p160
      %p162 = scmp.ne.s32.totalorder %s151, %s154
      %p163 = scmp.eq.s32.totalorder %s22, 1
      %p164 = por %p162, %p163
      %p165 = scmp.ne.s32.totalorder %s154, %s155
      %p166 = scmp.eq.s32.totalorder %s22, 0
      %p167 = por %p165, %p166
      %p168 = scmp.ne.s32.totalorder %s154, %s155
      %p169 = scmp.eq.s32.totalorder %s23, 1
      %p170 = por %p168, %p169
      %p172 = scmp.ne.s32.totalorder %s155, %s171
      %p173 = scmp.eq.s32.totalorder %s23, 0
      %p174 = por %p172, %p173
      %s175 = ssub.s32 %s24, %s36
      %p176 = scmp.eq.s32.totalorder %s175, 0
      %s178 = sadd.s32 %s177, 1
      %s179 = scalar_select %p176, %s177, %s178
      %p182 = pneg %p176
      %p183 = scmp.eq.s32.totalorder %s17, 1
      %p184 = por %p182, %p183
      %p185 = scmp.ne.s32.totalorder %s177, %s180
      %p186 = scmp.eq.s32.totalorder %s17, 0
      %p187 = por %p185, %p186
      %p188 = scmp.ne.s32.totalorder %s177, %s180
      %p189 = scmp.eq.s32.totalorder %s22, 1
      %p190 = por %p188, %p189
      %p191 = scmp.ne.s32.totalorder %s180, %s181
      %p192 = scmp.eq.s32.totalorder %s22, 0
      %p193 = por %p191, %p192
      %p194 = scmp.ne.s32.totalorder %s180, %s181
      %p195 = scmp.eq.s32.totalorder %s23, 1
      %p196 = por %p194, %p195
      %p198 = scmp.ne.s32.totalorder %s181, %s197
      %p199 = scmp.eq.s32.totalorder %s23, 0
      %p200 = por %p198, %p199
      %s201 = ssub.s32 %s24, %s36
      %p202 = scmp.eq.s32.totalorder %s201, 0
      %s204 = sadd.s32 %s203, 1
      %s205 = scalar_select %p202, %s203, %s204
      %p208 = pneg %p202
      %p209 = scmp.eq.s32.totalorder %s17, 1
      %p210 = por %p208, %p209
      %p211 = scmp.ne.s32.totalorder %s203, %s206
      %p212 = scmp.eq.s32.totalorder %s17, 0
      %p213 = por %p211, %p212
      %p214 = scmp.ne.s32.totalorder %s203, %s206
      %p215 = scmp.eq.s32.totalorder %s22, 1
      %p216 = por %p214, %p215
      %p217 = scmp.ne.s32.totalorder %s206, %s207
      %p218 = scmp.eq.s32.totalorder %s22, 0
      %p219 = por %p217, %p218
      %p220 = scmp.ne.s32.totalorder %s206, %s207
      %p221 = scmp.eq.s32.totalorder %s23, 1
      %p222 = por %p220, %p221
      %p224 = scmp.ne.s32.totalorder %s207, %s223
      %p225 = scmp.eq.s32.totalorder %s23, 0
      %p226 = por %p224, %p225
      %p227 = scmp.le.s32.totalorder 1, %s17
      %p228 = scmp.lt.s32.totalorder %s17, 3
      %p229 = pnand %p227, %p228
      %p230 = pneg %p229
      // Predicated region
      $region9: #{tpu_custom_call.1} parent=5 // pred_check
        _
      $region10: #{tpu_custom_call.1} parent=5 // pred_check_branch
        %232 = sbr.rel (%p229) target = $region12
      $region11: #{tpu_custom_call.1} parent=5 // pred_region
        %s233 = ssub.s32 %s17, 1
        // Predicated region
        $region13: #{tpu_custom_call.1} parent=11 // pred_check
          %p234 = pneg %p78
        $region14: #{tpu_custom_call.1} parent=11 // pred_check_branch
          %236 = sbr.rel (%p234) target = $region16
        $region15: #{tpu_custom_call.1} parent=11 // pred_region
          _
        $region16: #{tpu_custom_call.1} parent=11 // pred_fallthru
          _
        // Predicated region
        $region17: #{tpu_custom_call.1} parent=11 // pred_check
          %p237 = pneg %p99
        $region18: #{tpu_custom_call.1} parent=11 // pred_check_branch
          %239 = sbr.rel (%p237) target = $region20
        $region19: #{tpu_custom_call.1} parent=11 // pred_region
          _
        $region20: #{tpu_custom_call.1} parent=11 // pred_fallthru
          _
        // Predicated region
        $region21: #{tpu_custom_call.1} parent=11 // pred_check
          %p240 = pneg %p120
        $region22: #{tpu_custom_call.1} parent=11 // pred_check_branch
          %242 = sbr.rel (%p240) target = $region24
        $region23: #{tpu_custom_call.1} parent=11 // pred_region
          _
        $region24: #{tpu_custom_call.1} parent=11 // pred_fallthru
          _
        // Predicated region
        $region25: #{tpu_custom_call.1} parent=11 // pred_check
          %p243 = pneg %p141
        $region26: #{tpu_custom_call.1} parent=11 // pred_check_branch
          %245 = sbr.rel (%p243) target = $region28
        $region27: #{tpu_custom_call.1} parent=11 // pred_region
          _
        $region28: #{tpu_custom_call.1} parent=11 // pred_fallthru
          _
      $region12: #{tpu_custom_call.1} parent=5 // pred_fallthru
        _
      %p246 = scmp.lt.s32.totalorder %s17, 2
      // Predicated region
      $region29: #{tpu_custom_call.1} parent=5 // pred_check
        %p247 = pneg %p246
      $region30: #{tpu_custom_call.1} parent=5 // pred_check_branch
        %249 = sbr.rel (%p247) target = $region32
      $region31: #{tpu_custom_call.1} parent=5 // pred_region
        // Predicated region
        $region33: #{tpu_custom_call.1} parent=31 // pred_check
          %p250 = pneg %p51
        $region34: #{tpu_custom_call.1} parent=31 // pred_check_branch
          %252 = sbr.rel (%p250) target = $region36
        $region35: #{tpu_custom_call.1} parent=31 // pred_region
          %s253 = sand.u32 %s41, 1
          %s254 = scalar_lea.sflag [#allocation3], %s253
          %s255 = sand.u32 %s41, 1
          %s256 = smul.addr %s255, 128
          %s257 = scalar_lea.vmem [#allocation2], %s256
          %s258 = smul.u32 2, %s25
          %s260 = ssub.s32 2048, 2048
          %261 = vsyncadd %s254, %s260
          %s262 = smul.addr %s24, 16
          %s263 = sadd.s32 %s258, %s262
          %s264 = smul.addr %s263, 128
          %s265 = scalar_lea.hbm %s0, %s264
          %s266 = sshll.u32 %s257, 4
          %s267 = int_to_ptr.vmem [resolvable:$true] %s266
          %272 = dma.hbm_to_vmem [thread:$0]  %s265, 2048, %s267, %s254, 256, 256, 16
        $region36: #{tpu_custom_call.1} parent=31 // pred_fallthru
          _
      $region32: #{tpu_custom_call.1} parent=5 // pred_fallthru
        _
      %p273 = scmp.le.s32.totalorder 1, %s17
      %p274 = scmp.lt.s32.totalorder %s17, 3
      %p275 = pnand %p273, %p274
      %p276 = pneg %p275
      // Predicated region
      $region37: #{tpu_custom_call.1} parent=5 // pred_check
        _
      $region38: #{tpu_custom_call.1} parent=5 // pred_check_branch
        %278 = sbr.rel (%p275) target = $region40
      $region39: #{tpu_custom_call.1} parent=5 // pred_region
        %s279 = ssub.s32 %s17, 1
        %s280 = sand.u32 %s44, 1
        %s281 = scalar_lea.sflag [#allocation3], %s280
        %s282 = sand.u32 %s44, 1
        %s283 = smul.addr %s282, 128
        %s284 = scalar_lea.vmem [#allocation2], %s283
        // Predicated region
        $region41: #{tpu_custom_call.1} parent=39 // pred_check
          %p285 = pneg %p57
        $region42: #{tpu_custom_call.1} parent=39 // pred_check_branch
          %287 = sbr.rel (%p285) target = $region44
        $region43: #{tpu_custom_call.1} parent=39 // pred_region
          %288 = dma.done %s281, 2048
        $region44: #{tpu_custom_call.1} parent=39 // pred_fallthru
          _
        %s289 = sand.u32 %s44, 1
        %s290 = scalar_lea.sflag [#allocation3], %s289
        %s291 = sand.u32 %s44, 1
        %s292 = smul.addr %s291, 128
        %s293 = scalar_lea.vmem [#allocation2], %s292
        %p294 = pneg %p57
        %p295 = pneg %p54
        %p296 = pneg %p78
        %p297 = pneg %p75
        %p298 = pneg %p99
        %p299 = pneg %p96
        %p300 = pneg %p120
        %p301 = pneg %p117
        %p302 = pneg %p141
        %p303 = pneg %p138
        %p304 = pneg %p167
        %p305 = pneg %p164
        %p306 = scmp.lt.s32.totalorder %s26, 1
        %s307 = scalar_select %p306, %s26, 1
        %s308 = smul.addr %s307, 8
        %s309 = smul.addr %s308, 8
        %s310 = scalar_lea.vmem %s5, %s309
        %p311 = pneg %p193
        %p312 = pneg %p190
        %p313 = scmp.lt.s32.totalorder %s26, 1
        %s314 = scalar_select %p313, %s26, 1
        %s315 = smul.addr %s314, 8
        %s316 = scalar_lea.vmem %s6, %s315
        %p317 = pneg %p219
        %p318 = pneg %p216
        %p319 = scmp.lt.s32.totalorder %s26, 1
        %s320 = scalar_select %p319, %s26, 1
        %s321 = smul.addr %s320, 8
        %s322 = smul.addr %s321, 8
        %s323 = scalar_lea.vmem %s7, %s322
        %s324 = smul.u32 2, %s27
        %p325 = scmp.lt.s32.totalorder %s26, 1
        %s326 = scalar_select %p325, %s26, 1
        %s327 = smul.addr %s326, 8
        %s328 = smul.addr %s327, 8
        %s329 = scalar_lea.vmem %s5, %s328
        %p330 = scmp.lt.s32.totalorder %s26, 1
        %s331 = scalar_select %p330, %s26, 1
        %s332 = smul.addr %s331, 8
        %s333 = scalar_lea.vmem %s6, %s332
        %p334 = scmp.lt.s32.totalorder %s26, 1
        %s335 = scalar_select %p334, %s26, 1
        %s336 = smul.addr %s335, 8
        %s337 = smul.addr %s336, 8
        %s338 = scalar_lea.vmem %s7, %s337
        %p339 = scmp.eq.s32.totalorder %s27, 0
        // Predicated region
        $region45: #{tpu_custom_call.1} parent=39 // pred_check
          %p340 = pneg %p339
        $region46: #{tpu_custom_call.1} parent=39 // pred_check_branch
          %342 = sbr.rel (%p340) target = $region48
        $region47: #{tpu_custom_call.1} parent=39 // pred_region
          %vm343 = vcmask 64512
          %344 = vst.msk [vmem:[%s329] sm:$0xff] %vm343, 0.0
          %345 = vst.msk [vmem:[%s329 + $0x8] sm:$0xff] %vm343, 0.0
          %346 = vst.msk [vmem:[%s329 + $0x10] sm:$0xff] %vm343, 0.0
          %347 = vst.msk [vmem:[%s329 + $0x18] sm:$0xff] %vm343, 0.0
          %348 = vst.msk [vmem:[%s329 + $0x20] sm:$0xff] %vm343, 0.0
          %349 = vst.msk [vmem:[%s329 + $0x28] sm:$0xff] %vm343, 0.0
          %350 = vst.msk [vmem:[%s329 + $0x30] sm:$0xff] %vm343, 0.0
          %351 = vst.msk [vmem:[%s329 + $0x38] sm:$0xff] %vm343, 0.0
          %vm352 = vcmask 7168
          %353 = vst.msk [vmem:[%s333] sm:$0xff] %vm352, 0.0
          %354 = vst.msk [vmem:[%s338] sm:$0xff] %vm352, 0.0
          %355 = vst.msk [vmem:[%s338 + $0x8] sm:$0xff] %vm352, 0.0
          %356 = vst.msk [vmem:[%s338 + $0x10] sm:$0xff] %vm352, 0.0
          %357 = vst.msk [vmem:[%s338 + $0x18] sm:$0xff] %vm352, 0.0
          %358 = vst.msk [vmem:[%s338 + $0x20] sm:$0xff] %vm352, 0.0
          %359 = vst.msk [vmem:[%s338 + $0x28] sm:$0xff] %vm352, 0.0
          %360 = vst.msk [vmem:[%s338 + $0x30] sm:$0xff] %vm352, 0.0
          %361 = vst.msk [vmem:[%s338 + $0x38] sm:$0xff] %vm352, 0.0
        $region48: #{tpu_custom_call.1} parent=39 // pred_fallthru
          _
        %v362 = vld [vmem:[%s284] sm:$0xff]
        %v363 = vld [vmem:[%s284 + $0x8] sm:$0xff]
        %v364 = vld [vmem:[%s284 + $0x10] sm:$0xff]
        %v365 = vld [vmem:[%s284 + $0x18] sm:$0xff]
        %v366 = vld [vmem:[%s284 + $0x20] sm:$0xff]
        %v367 = vld [vmem:[%s284 + $0x28] sm:$0xff]
        %v368 = vld [vmem:[%s284 + $0x30] sm:$0xff]
        %v369 = vld [vmem:[%s284 + $0x38] sm:$0xff]
        %v370 = vld [vmem:[%s284 + $0x40] sm:$0xff]
        %v371 = vld [vmem:[%s284 + $0x48] sm:$0xff]
        %v372 = vld [vmem:[%s284 + $0x50] sm:$0xff]
        %v373 = vld [vmem:[%s284 + $0x58] sm:$0xff]
        %v374 = vld [vmem:[%s284 + $0x60] sm:$0xff]
        %v375 = vld [vmem:[%s284 + $0x68] sm:$0xff]
        %v376 = vld [vmem:[%s284 + $0x70] sm:$0xff]
        %v377 = vld [vmem:[%s284 + $0x78] sm:$0xff]
        %v378 = vld [vmem:[%s1] sm:$0xff]
        %v379 = vld [vmem:[%s2] sm:$0xff]
        %381 = vset.pattern.permute.xlu0 0
        %382 = vperm.xlu0 %381, %v379
        %v383 = vpop.permute.xlu0 %382
        %vm385 = vcmask 523264
        %v387 = vsel %vm385, %v378, 0
        %389 = vmatprep.subr.mxu0 0.0
        %390 = vmatpush1.msra.mxu0 0.0
        %391 = vmatprep.subr.mxu0 0.0
        %392 = vmatpush1.msra.mxu0 0.0
        %393 = vmatprep.subr.mxu0 0.0
        %394 = vmatpush1.msra.mxu0 0.0
        %395 = vmatprep.subr.mxu0 0.0
        %396 = vmatpush1.msra.mxu0 0.0
        %397 = vmatprep.subr.mxu0 0.0
        %398 = vmatpush1.msra.mxu0 0.0
        %399 = vmatprep.subr.mxu0 0.0
        %400 = vmatpush1.msra.mxu0 0.0
        %401 = vmatprep.subr.mxu0 0.0
        %402 = vmatpush1.msra.mxu0 0.0
        %403 = vmatprep.subr.mxu0 0.0
        %404 = vmatpush1.msra.mxu0 0.0
        %405 = vmatprep.subr.mxu0 %v377
        %406 = vmatpush1.msra.mxu0 %v376
        %407 = vmatprep.subr.mxu0 %v375
        %408 = vmatpush1.msra.mxu0 %v374
        %409 = vmatprep.subr.mxu0 %v373
        %410 = vmatpush1.msra.mxu0 %v372
        %411 = vmatprep.subr.mxu0 %v371
        %412 = vmatpush1.msra.mxu0 %v370
        %413 = vmatprep.subr.mxu0 %v369
        %414 = vmatpush1.msra.mxu0 %v368
        %415 = vmatprep.subr.mxu0 %v367
        %416 = vmatpush1.msra.mxu0 %v366
        %417 = vmatprep.subr.mxu0 %v365
        %418 = vmatpush1.msra.mxu0 %v364
        %419 = vmatprep.subr.mxu0 %v363
        %420 = vmatpush1.msra.mxu0 %v362
        %421 = vmatprep.subr.mxu0 0.0
        %422 = vmatpush2.msra.mxu0 0.0
        %423 = vmatprep.subr.mxu0 0.0
        %424 = vmatpush2.msra.mxu0 0.0
        %425 = vmatprep.subr.mxu0 0.0
        %426 = vmatpush2.msra.mxu0 0.0
        %427 = vmatprep.subr.mxu0 0.0
        %428 = vmatpush2.msra.mxu0 0.0
        %429 = vmatprep.subr.mxu0 0.0
        %430 = vmatpush2.msra.mxu0 0.0
        %431 = vmatprep.subr.mxu0 0.0
        %432 = vmatpush2.msra.mxu0 0.0
        %433 = vmatprep.subr.mxu0 0.0
        %434 = vmatpush2.msra.mxu0 0.0
        %435 = vmatprep.subr.mxu0 0.0
        %436 = vmatpush2.msra.mxu0 0.0
        %437 = vmatprep.subr.mxu0 0.0
        %438 = vmatpush2.msra.mxu0 0.0
        %439 = vmatprep.subr.mxu0 0.0
        %440 = vmatpush2.msra.mxu0 0.0
        %441 = vmatprep.subr.mxu0 0.0
        %442 = vmatpush2.msra.mxu0 0.0
        %443 = vmatprep.subr.mxu0 0.0
        %444 = vmatpush2.msra.mxu0 0.0
        %445 = vmatprep.subr.mxu0 0.0
        %446 = vmatpush2.msra.mxu0 0.0
        %447 = vmatprep.subr.mxu0 0.0
        %448 = vmatpush2.msra.mxu0 0.0
        %449 = vmatprep.subr.mxu0 0.0
        %450 = vmatpush2.msra.mxu0 0.0
        %451 = vmatprep.subr.mxu0 0.0
        %452 = vmatpush2.msra.mxu0 0.0
        %453 = vmatprep.mubr.f32.mxu0 0.0
        %454 = vmatmul.mubr.f32.gmra.mxu0 %v387
        %v455 = vpop.f32.mrf.mxu0
        %v456 = vadd.f32 %v383, %v455
        %v457 = vpop.f32.mrf.mxu0
        %v458 = vadd.f32 %v383, %v457
        %459 = vdwg.mxu0
        %v460 = vmul.f32 %v456, %v456
        %v461 = vmul.f32 %v458, %v458
        %v462 = vrot.slane %v460, 4
        %v463 = vadd.f32 %v460, %v462
        %v464 = vrot.slane %v463, 2
        %v465 = vadd.f32 %v463, %v464
        %v466 = vrot.slane %v465, 1
        %v467 = vadd.f32 %v465, %v466
        %v468 = vrot.slane %v461, 4
        %v469 = vadd.f32 %v461, %v468
        %v470 = vrot.slane %v469, 2
        %v471 = vadd.f32 %v469, %v470
        %v472 = vrot.slane %v471, 1
        %v473 = vadd.f32 %v471, %v472
        %v474 = vrsqrt.pop %v467
        %v475 = vrsqrt.pop %v473
        %v476 = vmul.f32 %v456, %v474
        %v477 = vmul.f32 %v458, %v475
        %v478 = vld [vmem:[%s3] sm:$0xff]
        %v479 = vld [vmem:[%s3 + $0x8] sm:$0xff]
        %v480 = vld [vmem:[%s3 + $0x10] sm:$0xff]
        %v481 = vld [vmem:[%s3 + $0x18] sm:$0xff]
        %v482 = vld [vmem:[%s3 + $0x20] sm:$0xff]
        %v483 = vld [vmem:[%s3 + $0x28] sm:$0xff]
        %v484 = vld [vmem:[%s3 + $0x30] sm:$0xff]
        %v485 = vld [vmem:[%s3 + $0x38] sm:$0xff]
        %v486 = vld [vmem:[%s4] sm:$0xff]
        %v487 = vld [vmem:[%s4 + $0x8] sm:$0xff]
        %v488 = vld [vmem:[%s4 + $0x10] sm:$0xff]
        %v489 = vld [vmem:[%s4 + $0x18] sm:$0xff]
        %v490 = vld [vmem:[%s4 + $0x20] sm:$0xff]
        %v491 = vld [vmem:[%s4 + $0x28] sm:$0xff]
        %v492 = vld [vmem:[%s4 + $0x30] sm:$0xff]
        %v493 = vld [vmem:[%s4 + $0x38] sm:$0xff]
        %495 = vset.pattern.permute.xlu0 0
        %496 = vperm.xlu0 %495, %v486
        %v497 = vpop.permute.xlu0 %496
        %500 = vset.pattern.permute.xlu0 0
        %501 = vperm.xlu0 %500, %v487
        %v502 = vpop.permute.xlu0 %501
        %505 = vset.pattern.permute.xlu0 0
        %506 = vperm.xlu0 %505, %v488
        %v507 = vpop.permute.xlu0 %506
        %510 = vset.pattern.permute.xlu0 0
        %511 = vperm.xlu0 %510, %v489
        %v512 = vpop.permute.xlu0 %511
        %515 = vset.pattern.permute.xlu0 0
        %516 = vperm.xlu0 %515, %v490
        %v517 = vpop.permute.xlu0 %516
        %520 = vset.pattern.permute.xlu0 0
        %521 = vperm.xlu0 %520, %v491
        %v522 = vpop.permute.xlu0 %521
        %525 = vset.pattern.permute.xlu0 0
        %526 = vperm.xlu0 %525, %v492
        %v527 = vpop.permute.xlu0 %526
        %530 = vset.pattern.permute.xlu0 0
        %531 = vperm.xlu0 %530, %v493
        %v532 = vpop.permute.xlu0 %531
        %v535 = vsel %vm385, %v478, 0
        %v538 = vsel %vm385, %v479, 0
        %v541 = vsel %vm385, %v480, 0
        %v544 = vsel %vm385, %v481, 0
        %v547 = vsel %vm385, %v482, 0
        %v550 = vsel %vm385, %v483, 0
        %v553 = vsel %vm385, %v484, 0
        %v556 = vsel %vm385, %v485, 0
        %558 = vmatprep.subr.mxu0 0.0
        %559 = vmatpush1.msra.mxu0 0.0
        %560 = vmatprep.subr.mxu0 0.0
        %561 = vmatpush1.msra.mxu0 0.0
        %562 = vmatprep.subr.mxu0 0.0
        %563 = vmatpush1.msra.mxu0 0.0
        %564 = vmatprep.subr.mxu0 0.0
        %565 = vmatpush1.msra.mxu0 0.0
        %566 = vmatprep.subr.mxu0 0.0
        %567 = vmatpush1.msra.mxu0 0.0
        %568 = vmatprep.subr.mxu0 0.0
        %569 = vmatpush1.msra.mxu0 0.0
        %570 = vmatprep.subr.mxu0 0.0
        %571 = vmatpush1.msra.mxu0 0.0
        %572 = vmatprep.subr.mxu0 0.0
        %573 = vmatpush1.msra.mxu0 0.0
        %574 = vmatprep.subr.mxu0 %v377
        %575 = vmatpush1.msra.mxu0 %v376
        %576 = vmatprep.subr.mxu0 %v375
        %577 = vmatpush1.msra.mxu0 %v374
        %578 = vmatprep.subr.mxu0 %v373
        %579 = vmatpush1.msra.mxu0 %v372
        %580 = vmatprep.subr.mxu0 %v371
        %581 = vmatpush1.msra.mxu0 %v370
        %582 = vmatprep.subr.mxu0 %v369
        %583 = vmatpush1.msra.mxu0 %v368
        %584 = vmatprep.subr.mxu0 %v367
        %585 = vmatpush1.msra.mxu0 %v366
        %586 = vmatprep.subr.mxu0 %v365
        %587 = vmatpush1.msra.mxu0 %v364
        %588 = vmatprep.subr.mxu0 %v363
        %589 = vmatpush1.msra.mxu0 %v362
        %590 = vmatprep.subr.mxu0 0.0
        %591 = vmatpush2.msra.mxu0 0.0
        %592 = vmatprep.subr.mxu0 0.0
        %593 = vmatpush2.msra.mxu0 0.0
        %594 = vmatprep.subr.mxu0 0.0
        %595 = vmatpush2.msra.mxu0 0.0
        %596 = vmatprep.subr.mxu0 0.0
        %597 = vmatpush2.msra.mxu0 0.0
        %598 = vmatprep.subr.mxu0 0.0
        %599 = vmatpush2.msra.mxu0 0.0
        %600 = vmatprep.subr.mxu0 0.0
        %601 = vmatpush2.msra.mxu0 0.0
        %602 = vmatprep.subr.mxu0 0.0
        %603 = vmatpush2.msra.mxu0 0.0
        %604 = vmatprep.subr.mxu0 0.0
        %605 = vmatpush2.msra.mxu0 0.0
        %606 = vmatprep.subr.mxu0 0.0
        %607 = vmatpush2.msra.mxu0 0.0
        %608 = vmatprep.subr.mxu0 0.0
        %609 = vmatpush2.msra.mxu0 0.0
        %610 = vmatprep.subr.mxu0 0.0
        %611 = vmatpush2.msra.mxu0 0.0
        %612 = vmatprep.subr.mxu0 0.0
        %613 = vmatpush2.msra.mxu0 0.0
        %614 = vmatprep.subr.mxu0 0.0
        %615 = vmatpush2.msra.mxu0 0.0
        %616 = vmatprep.subr.mxu0 0.0
        %617 = vmatpush2.msra.mxu0 0.0
        %618 = vmatprep.subr.mxu0 0.0
        %619 = vmatpush2.msra.mxu0 0.0
        %620 = vmatprep.subr.mxu0 0.0
        %621 = vmatpush2.msra.mxu0 0.0
        %622 = vmatprep.mubr.f32.mxu0 0.0
        %623 = vmatmul.mubr.f32.gmra.mxu0 %v535
        %v624 = vpop.f32.mrf.mxu0
        %v625 = vadd.f32 %v497, %v624
        %v626 = vpop.f32.mrf.mxu0
        %v627 = vadd.f32 %v497, %v626
        %628 = vmatprep.mubr.f32.mxu0 0.0
        %629 = vmatmul.mubr.f32.gmra.mxu0 %v538
        %v630 = vpop.f32.mrf.mxu0
        %v631 = vadd.f32 %v502, %v630
        %v632 = vpop.f32.mrf.mxu0
        %v633 = vadd.f32 %v502, %v632
        %634 = vmatprep.mubr.f32.mxu0 0.0
        %635 = vmatmul.mubr.f32.gmra.mxu0 %v541
        %v636 = vpop.f32.mrf.mxu0
        %v637 = vadd.f32 %v507, %v636
        %v638 = vpop.f32.mrf.mxu0
        %v639 = vadd.f32 %v507, %v638
        %640 = vmatprep.mubr.f32.mxu0 0.0
        %641 = vmatmul.mubr.f32.gmra.mxu0 %v544
        %v642 = vpop.f32.mrf.mxu0
        %v643 = vadd.f32 %v512, %v642
        %v644 = vpop.f32.mrf.mxu0
        %v645 = vadd.f32 %v512, %v644
        %646 = vmatprep.mubr.f32.mxu0 0.0
        %647 = vmatmul.mubr.f32.gmra.mxu0 %v547
        %v648 = vpop.f32.mrf.mxu0
        %v649 = vadd.f32 %v517, %v648
        %v650 = vpop.f32.mrf.mxu0
        %v651 = vadd.f32 %v517, %v650
        %652 = vmatprep.mubr.f32.mxu0 0.0
        %653 = vmatmul.mubr.f32.gmra.mxu0 %v550
        %v654 = vpop.f32.mrf.mxu0
        %v655 = vadd.f32 %v522, %v654
        %v656 = vpop.f32.mrf.mxu0
        %v657 = vadd.f32 %v522, %v656
        %658 = vmatprep.mubr.f32.mxu0 0.0
        %659 = vmatmul.mubr.f32.gmra.mxu0 %v553
        %v660 = vpop.f32.mrf.mxu0
        %v661 = vadd.f32 %v527, %v660
        %v662 = vpop.f32.mrf.mxu0
        %v663 = vadd.f32 %v527, %v662
        %664 = vmatprep.mubr.f32.mxu0 0.0
        %665 = vmatmul.mubr.f32.gmra.mxu0 %v556
        %v666 = vpop.f32.mrf.mxu0
        %v667 = vadd.f32 %v532, %v666
        %v668 = vpop.f32.mrf.mxu0
        %v669 = vadd.f32 %v532, %v668
        %670 = vdwg.mxu0
        %v671 = vld [vmem:[%s329] sm:$0xff]
        %v672 = vld [vmem:[%s329 + $0x8] sm:$0xff]
        %v673 = vld [vmem:[%s329 + $0x10] sm:$0xff]
        %v674 = vld [vmem:[%s329 + $0x18] sm:$0xff]
        %v675 = vld [vmem:[%s329 + $0x20] sm:$0xff]
        %v676 = vld [vmem:[%s329 + $0x28] sm:$0xff]
        %v677 = vld [vmem:[%s329 + $0x30] sm:$0xff]
        %v678 = vld [vmem:[%s329 + $0x38] sm:$0xff]
        %679 = vmatprep.subr.mxu0 0.0
        %680 = vmatpush1.xpose.msra.mxu0 0.0
        %681 = vmatprep.subr.mxu0 0.0
        %682 = vmatpush1.xpose.msra.mxu0 0.0
        %683 = vmatprep.subr.mxu0 0.0
        %684 = vmatpush1.xpose.msra.mxu0 0.0
        %685 = vmatprep.subr.mxu0 0.0
        %686 = vmatpush1.xpose.msra.mxu0 0.0
        %687 = vmatprep.subr.mxu0 0.0
        %688 = vmatpush1.xpose.msra.mxu0 0.0
        %689 = vmatprep.subr.mxu0 0.0
        %690 = vmatpush1.xpose.msra.mxu0 0.0
        %691 = vmatprep.subr.mxu0 0.0
        %692 = vmatpush1.xpose.msra.mxu0 0.0
        %693 = vmatprep.subr.mxu0 0.0
        %694 = vmatpush1.xpose.msra.mxu0 0.0
        %695 = vmatprep.subr.mxu0 0.0
        %696 = vmatpush1.xpose.msra.mxu0 0.0
        %697 = vmatprep.subr.mxu0 0.0
        %698 = vmatpush1.xpose.msra.mxu0 0.0
        %699 = vmatprep.subr.mxu0 0.0
        %700 = vmatpush1.xpose.msra.mxu0 0.0
        %701 = vmatprep.subr.mxu0 0.0
        %702 = vmatpush1.xpose.msra.mxu0 0.0
        %703 = vmatprep.subr.mxu0 0.0
        %704 = vmatpush1.xpose.msra.mxu0 0.0
        %705 = vmatprep.subr.mxu0 0.0
        %706 = vmatpush1.xpose.msra.mxu0 0.0
        %707 = vmatprep.subr.mxu0 0.0
        %708 = vmatpush1.xpose.msra.mxu0 0.0
        %709 = vmatprep.subr.mxu0 %v477
        %710 = vmatpush1.xpose.msra.mxu0 %v476
        %711 = vmatprep.subr.mxu0 0.0
        %712 = vmatpush2.xpose.msra.mxu0 0.0
        %713 = vmatprep.subr.mxu0 0.0
        %714 = vmatpush2.xpose.msra.mxu0 0.0
        %715 = vmatprep.subr.mxu0 0.0
        %716 = vmatpush2.xpose.msra.mxu0 0.0
        %717 = vmatprep.subr.mxu0 0.0
        %718 = vmatpush2.xpose.msra.mxu0 0.0
        %719 = vmatprep.subr.mxu0 0.0
        %720 = vmatpush2.xpose.msra.mxu0 0.0
        %721 = vmatprep.subr.mxu0 0.0
        %722 = vmatpush2.xpose.msra.mxu0 0.0
        %723 = vmatprep.subr.mxu0 0.0
        %724 = vmatpush2.xpose.msra.mxu0 0.0
        %725 = vmatprep.subr.mxu0 0.0
        %726 = vmatpush2.xpose.msra.mxu0 0.0
        %727 = vmatprep.subr.mxu0 0.0
        %728 = vmatpush2.xpose.msra.mxu0 0.0
        %729 = vmatprep.subr.mxu0 0.0
        %730 = vmatpush2.xpose.msra.mxu0 0.0
        %731 = vmatprep.subr.mxu0 0.0
        %732 = vmatpush2.xpose.msra.mxu0 0.0
        %733 = vmatprep.subr.mxu0 0.0
        %734 = vmatpush2.xpose.msra.mxu0 0.0
        %735 = vmatprep.subr.mxu0 0.0
        %736 = vmatpush2.xpose.msra.mxu0 0.0
        %737 = vmatprep.subr.mxu0 0.0
        %738 = vmatpush2.xpose.msra.mxu0 0.0
        %739 = vmatprep.subr.mxu0 0.0
        %740 = vmatpush2.xpose.msra.mxu0 0.0
        %741 = vmatprep.subr.mxu0 0.0
        %742 = vmatpush2.xpose.msra.mxu0 0.0
        %743 = vmatprep.mubr.f32.mxu0 %v627
        %744 = vmatmul.mubr.f32.gmra.mxu0 %v625
        %v745 = vpop.f32.mrf.mxu0
        %v746 = vadd.f32 0.0, %v745
        %v747 = vpop.f32.mrf.mxu0
        %748 = vmatprep.mubr.f32.mxu0 %v633
        %749 = vmatmul.mubr.f32.gmra.mxu0 %v631
        %v750 = vpop.f32.mrf.mxu0
        %v751 = vadd.f32 0.0, %v750
        %v752 = vpop.f32.mrf.mxu0
        %753 = vmatprep.mubr.f32.mxu0 %v639
        %754 = vmatmul.mubr.f32.gmra.mxu0 %v637
        %v755 = vpop.f32.mrf.mxu0
        %v756 = vadd.f32 0.0, %v755
        %v757 = vpop.f32.mrf.mxu0
        %758 = vmatprep.mubr.f32.mxu0 %v645
        %759 = vmatmul.mubr.f32.gmra.mxu0 %v643
        %v760 = vpop.f32.mrf.mxu0
        %v761 = vadd.f32 0.0, %v760
        %v762 = vpop.f32.mrf.mxu0
        %763 = vmatprep.mubr.f32.mxu0 %v651
        %764 = vmatmul.mubr.f32.gmra.mxu0 %v649
        %v765 = vpop.f32.mrf.mxu0
        %v766 = vadd.f32 0.0, %v765
        %v767 = vpop.f32.mrf.mxu0
        %768 = vmatprep.mubr.f32.mxu0 %v657
        %769 = vmatmul.mubr.f32.gmra.mxu0 %v655
        %v770 = vpop.f32.mrf.mxu0
        %v771 = vadd.f32 0.0, %v770
        %v772 = vpop.f32.mrf.mxu0
        %773 = vmatprep.mubr.f32.mxu0 %v663
        %774 = vmatmul.mubr.f32.gmra.mxu0 %v661
        %v775 = vpop.f32.mrf.mxu0
        %v776 = vadd.f32 0.0, %v775
        %v777 = vpop.f32.mrf.mxu0
        %778 = vmatprep.mubr.f32.mxu0 %v669
        %779 = vmatmul.mubr.f32.gmra.mxu0 %v667
        %v780 = vpop.f32.mrf.mxu0
        %v781 = vadd.f32 0.0, %v780
        %v782 = vpop.f32.mrf.mxu0
        %783 = vdwg.mxu0
        %v784 = vadd.f32 %v671, %v746
        %v785 = vadd.f32 %v672, %v751
        %v786 = vadd.f32 %v673, %v756
        %v787 = vadd.f32 %v674, %v761
        %v788 = vadd.f32 %v675, %v766
        %v789 = vadd.f32 %v676, %v771
        %v790 = vadd.f32 %v677, %v776
        %v791 = vadd.f32 %v678, %v781
        %vm792 = vcmask 64512
        %793 = vst.msk [vmem:[%s329] sm:$0xff] %vm792, %v784
        %794 = vst.msk [vmem:[%s329 + $0x8] sm:$0xff] %vm792, %v785
        %795 = vst.msk [vmem:[%s329 + $0x10] sm:$0xff] %vm792, %v786
        %796 = vst.msk [vmem:[%s329 + $0x18] sm:$0xff] %vm792, %v787
        %797 = vst.msk [vmem:[%s329 + $0x20] sm:$0xff] %vm792, %v788
        %798 = vst.msk [vmem:[%s329 + $0x28] sm:$0xff] %vm792, %v789
        %799 = vst.msk [vmem:[%s329 + $0x30] sm:$0xff] %vm792, %v790
        %800 = vst.msk [vmem:[%s329 + $0x38] sm:$0xff] %vm792, %v791
        %v801 = vld [vmem:[%s333] sm:$0xff]
        %v802 = vadd.f32 %v476, %v477
        %803 = vadd.xlane.f32.xlu0 %v802
        %v804 = vpop.xlane.xlu0 %803
        %v805 = vadd.f32 %v801, %v804
        %vm806 = vcmask 7168
        %807 = vst.msk [vmem:[%s333] sm:$0xff] %vm806, %v805
        %v808 = vld [vmem:[%s338] sm:$0xff]
        %v809 = vld [vmem:[%s338 + $0x8] sm:$0xff]
        %v810 = vld [vmem:[%s338 + $0x10] sm:$0xff]
        %v811 = vld [vmem:[%s338 + $0x18] sm:$0xff]
        %v812 = vld [vmem:[%s338 + $0x20] sm:$0xff]
        %v813 = vld [vmem:[%s338 + $0x28] sm:$0xff]
        %v814 = vld [vmem:[%s338 + $0x30] sm:$0xff]
        %v815 = vld [vmem:[%s338 + $0x38] sm:$0xff]
        %v816 = vadd.f32 %v625, %v627
        %817 = vadd.xlane.f32.xlu0 %v816
        %v818 = vpop.xlane.xlu0 %817
        %v819 = vadd.f32 %v631, %v633
        %820 = vadd.xlane.f32.xlu0 %v819
        %v821 = vpop.xlane.xlu0 %820
        %v822 = vadd.f32 %v637, %v639
        %823 = vadd.xlane.f32.xlu0 %v822
        %v824 = vpop.xlane.xlu0 %823
        %v825 = vadd.f32 %v643, %v645
        %826 = vadd.xlane.f32.xlu0 %v825
        %v827 = vpop.xlane.xlu0 %826
        %v828 = vadd.f32 %v649, %v651
        %829 = vadd.xlane.f32.xlu0 %v828
        %v830 = vpop.xlane.xlu0 %829
        %v831 = vadd.f32 %v655, %v657
        %832 = vadd.xlane.f32.xlu0 %v831
        %v833 = vpop.xlane.xlu0 %832
        %v834 = vadd.f32 %v661, %v663
        %835 = vadd.xlane.f32.xlu0 %v834
        %v836 = vpop.xlane.xlu0 %835
        %v837 = vadd.f32 %v667, %v669
        %838 = vadd.xlane.f32.xlu0 %v837
        %v839 = vpop.xlane.xlu0 %838
        %v840 = vadd.f32 %v808, %v818
        %v841 = vadd.f32 %v809, %v821
        %v842 = vadd.f32 %v810, %v824
        %v843 = vadd.f32 %v811, %v827
        %v844 = vadd.f32 %v812, %v830
        %v845 = vadd.f32 %v813, %v833
        %v846 = vadd.f32 %v814, %v836
        %v847 = vadd.f32 %v815, %v839
        %848 = vst.msk [vmem:[%s338] sm:$0xff] %vm806, %v840
        %849 = vst.msk [vmem:[%s338 + $0x8] sm:$0xff] %vm806, %v841
        %850 = vst.msk [vmem:[%s338 + $0x10] sm:$0xff] %vm806, %v842
        %851 = vst.msk [vmem:[%s338 + $0x18] sm:$0xff] %vm806, %v843
        %852 = vst.msk [vmem:[%s338 + $0x20] sm:$0xff] %vm806, %v844
        %853 = vst.msk [vmem:[%s338 + $0x28] sm:$0xff] %vm806, %v845
        %854 = vst.msk [vmem:[%s338 + $0x30] sm:$0xff] %vm806, %v846
        %855 = vst.msk [vmem:[%s338 + $0x38] sm:$0xff] %vm806, %v847
        %p856 = scmp.lt.s32.totalorder %s26, 1
        %s857 = scalar_select %p856, %s26, 1
        %s858 = smul.addr %s857, 8
        %s859 = smul.addr %s858, 8
        %s860 = scalar_lea.vmem %s5, %s859
        %p861 = scmp.lt.s32.totalorder %s26, 1
        %s862 = scalar_select %p861, %s26, 1
        %s863 = smul.addr %s862, 8
        %s864 = scalar_lea.vmem %s6, %s863
        %p865 = scmp.lt.s32.totalorder %s26, 1
        %s866 = scalar_select %p865, %s26, 1
        %s867 = smul.addr %s866, 8
        %s868 = smul.addr %s867, 8
        %s869 = scalar_lea.vmem %s7, %s868
        // Predicated region
        $region49: #{tpu_custom_call.1} parent=39 // pred_check
          %p870 = pneg %p164
        $region50: #{tpu_custom_call.1} parent=39 // pred_check_branch
          %872 = sbr.rel (%p870) target = $region52
        $region51: #{tpu_custom_call.1} parent=39 // pred_region
          _
        $region52: #{tpu_custom_call.1} parent=39 // pred_fallthru
          _
        // Predicated region
        $region53: #{tpu_custom_call.1} parent=39 // pred_check
          %p873 = pneg %p190
        $region54: #{tpu_custom_call.1} parent=39 // pred_check_branch
          %875 = sbr.rel (%p873) target = $region56
        $region55: #{tpu_custom_call.1} parent=39 // pred_region
          _
        $region56: #{tpu_custom_call.1} parent=39 // pred_fallthru
          _
        // Predicated region
        $region57: #{tpu_custom_call.1} parent=39 // pred_check
          %p876 = pneg %p216
        $region58: #{tpu_custom_call.1} parent=39 // pred_check_branch
          %878 = sbr.rel (%p876) target = $region60
        $region59: #{tpu_custom_call.1} parent=39 // pred_region
          _
        $region60: #{tpu_custom_call.1} parent=39 // pred_fallthru
          _
      $region40: #{tpu_custom_call.1} parent=5 // pred_fallthru
        _
      %p879 = scmp.le.s32.totalorder 2, %s17
      // Predicated region
      $region61: #{tpu_custom_call.1} parent=5 // pred_check
        %p880 = pneg %p879
      $region62: #{tpu_custom_call.1} parent=5 // pred_check_branch
        %882 = sbr.rel (%p880) target = $region64
      $region63: #{tpu_custom_call.1} parent=5 // pred_region
        %s883 = ssub.s32 %s17, 2
        // Predicated region
        $region65: #{tpu_custom_call.1} parent=63 // pred_check
          %p884 = pneg %p170
        $region66: #{tpu_custom_call.1} parent=63 // pred_check_branch
          %886 = sbr.rel (%p884) target = $region68
        $region67: #{tpu_custom_call.1} parent=63 // pred_region
          %p887 = scmp.lt.s32.totalorder %s28, 1
          %s888 = scalar_select %p887, %s28, 1
          %s889 = smul.addr %s888, 8
          %s890 = smul.addr %s889, 8
          %s891 = scalar_lea.vmem %s5, %s890
        $region68: #{tpu_custom_call.1} parent=63 // pred_fallthru
          _
        // Predicated region
        $region69: #{tpu_custom_call.1} parent=63 // pred_check
          %p892 = pneg %p196
        $region70: #{tpu_custom_call.1} parent=63 // pred_check_branch
          %894 = sbr.rel (%p892) target = $region72
        $region71: #{tpu_custom_call.1} parent=63 // pred_region
          %p895 = scmp.lt.s32.totalorder %s28, 1
          %s896 = scalar_select %p895, %s28, 1
          %s897 = smul.addr %s896, 8
          %s898 = scalar_lea.vmem %s6, %s897
        $region72: #{tpu_custom_call.1} parent=63 // pred_fallthru
          _
        // Predicated region
        $region73: #{tpu_custom_call.1} parent=63 // pred_check
          %p899 = pneg %p222
        $region74: #{tpu_custom_call.1} parent=63 // pred_check_branch
          %901 = sbr.rel (%p899) target = $region76
        $region75: #{tpu_custom_call.1} parent=63 // pred_region
          %p902 = scmp.lt.s32.totalorder %s28, 1
          %s903 = scalar_select %p902, %s28, 1
          %s904 = smul.addr %s903, 8
          %s905 = smul.addr %s904, 8
          %s906 = scalar_lea.vmem %s7, %s905
        $region76: #{tpu_custom_call.1} parent=63 // pred_fallthru
          _
      $region64: #{tpu_custom_call.1} parent=5 // pred_fallthru
        _
    $region6: #{tpu_custom_call.1} parent=1 // loop_footer
      %s21 = sadd.s32 1, %s17
    $region7: #{tpu_custom_call.1} parent=1 // loop_footer_branch
      %16 = sbr.rel target = $region3
    $region8: #{tpu_custom_call.1} parent=1 // loop_exit
      _
    %907 = vsyncpa [#allocation3], 1
    %s908 = scalar_lea.sflag [#allocation3], 1
    %909 = vsyncpa %s908, 1

</llo_original>
